<compile_context>
chip_gen: v5e
topology: v5e:2x2
jax: 0.10.0
libtpu: 0.0.40
codegen_flags: <defaults>
</compile_context>

<pallas_src>
import functools

import jax
import jax.numpy as jnp
from jax.experimental import pallas as pl
from jax.experimental.pallas import tpu as pltpu


# ---- physical constants (match the PyTorch __init__ defaults) ----------------
L1, L2 = 1.0, 0.9
M1, M2 = 5.0, 4.9
F = 2.0
G = 9.81
D1 = L1 / 2.0
D2 = L2 / 2.0
A1 = M1 * D1 ** 2 + M2 * L1 ** 2
A2 = M2 * D2 ** 2
A3 = M2 * L1 * D2
A4 = M1 * D1 + M2 * L1
A5 = M2 * D2

LANES = 128  # lane width of a vreg


def _double_pendulum_kernel(u_ref, x_ref, dx_ref):
    # x_ref : (4, S, 128)  features = [q1, q2, q1_dot, q2_dot], batch on (S,128)
    # u_ref : (2, S, 128)  features = [u1, u2]
    # dx_ref: (4, S, 128)
    q1 = x_ref[0]
    q2 = x_ref[1]
    q1d = x_ref[2]
    q2d = x_ref[3]
    u1 = u_ref[0]
    u2 = u_ref[1]

    c2 = jnp.cos(q2)
    s2 = jnp.sin(q2)

    # Mass matrix M = [[m11, m12], [m12, A2]]   (m22 is the scalar constant A2)
    m11 = A1 + A2 + 2.0 * A3 * c2
    m12 = A2 + A3 * c2

    # Analytic 2x2 inverse: inv(M) = 1/det * [[A2, -m12], [-m12, m11]]
    det = m11 * A2 - m12 * m12
    inv_det = pl.reciprocal(det, approx=False)  # exact; well within 1e-4 tol

    # Coriolis:  C = A3*sin(q2) * [[-2*q2d, -q2d], [q1d, 0]];  compute C @ q_dot
    k = A3 * s2
    cq1 = k * (-2.0 * q2d) * q1d + k * (-q2d) * q2d
    cq2 = k * q1d * q1d

    # Gravity vector
    s12 = jnp.sin(q1 + q2)
    g1 = A4 * jnp.sin(q1) + A5 * s12
    g2 = A5 * s12

    # rhs = -C q_dot - g + u
    rhs1 = -cq1 - g1 + u1
    rhs2 = -cq2 - g2 + u2

    # q_ddot = inv(M) @ rhs
    qdd1 = inv_det * (A2 * rhs1 - m12 * rhs2)
    qdd2 = inv_det * (m11 * rhs2 - m12 * rhs1)

    # Dense (S, 128) slab stores — full sublane + lane occupancy.
    dx_ref[0] = q1d
    dx_ref[1] = q2d
    dx_ref[2] = qdd1
    dx_ref[3] = qdd2


def _pick_sublane_block(n_groups: int, block_b: int) -> int:
    """Choose the number of 128-lane batch groups per block.

    Multiple of 8 (sublane tile) unless it covers the whole (tiny) batch, and
    sized so that large batches get at least 2 grid steps (v7x megacore).
    """
    s_max = max(8, (max(block_b, LANES) // LANES) // 8 * 8)
    if n_groups <= 8:
        return n_groups            # single block equal to the full extent
    target = min(s_max, pl.cdiv(n_groups, 2))
    return max(8, (target // 8) * 8)


@functools.partial(jax.jit, static_argnames=("block_b",))
def double_pendulum_forward(u, x, *, block_b=65536):
    """u: (B, 2), x: (B, 4)  ->  (dx: (B, 4), y: (B, 2)), all float32."""
    B = x.shape[0]
    x = x.astype(jnp.float32)
    u = u.astype(jnp.float32)

    # y is a pure slice of the input — keep it out of the kernel.
    y = x[:, :2]

    # Feature-major layout, batch padded only to the next multiple of 128 so
    # it can be folded onto (groups, 128) = (sublanes..., lanes).  Everything
    # here is inside the same jit as the pallas_call, so XLA fuses the
    # transpose / pad / reshape into a single reformatting pass.
    n_groups = pl.cdiv(B, LANES)
    bp = n_groups * LANES
    x_t = x.T                                    # (4, B)
    u_t = u.T                                    # (2, B)
    if bp != B:
        x_t = jnp.pad(x_t, ((0, 0), (0, bp - B)))
        u_t = jnp.pad(u_t, ((0, 0), (0, bp - B)))
    x_r = x_t.reshape(4, n_groups, LANES)
    u_r = u_t.reshape(2, n_groups, LANES)

    s_blk = _pick_sublane_block(n_groups, block_b)
    grid_n = pl.cdiv(n_groups, s_blk)            # ragged last block is masked

    # in + out bytes per grid step (f32): x(4) + u(2) + dx(4) rows.
    step_bytes = (4 + 2 + 4) * s_blk * LANES * 4
    cp = dict(dimension_semantics=("parallel",))
    if 2 * step_bytes > (12 << 20):              # only raise when we need it
        cp["vmem_limit_bytes"] = min(3 * step_bytes + (2 << 20), 48 << 20)

    dx_r = pl.pallas_call(
        _double_pendulum_kernel,
        out_shape=jax.ShapeDtypeStruct((4, n_groups, LANES), jnp.float32),
        grid=(grid_n,),
        in_specs=[
            pl.BlockSpec((2, s_blk, LANES), lambda i: (0, i, 0)),
            pl.BlockSpec((4, s_blk, LANES), lambda i: (0, i, 0)),
        ],
        out_specs=pl.BlockSpec((4, s_blk, LANES), lambda i: (0, i, 0)),
        compiler_params=pltpu.CompilerParams(**cp),
    )(u_r, x_r)

    dx = dx_r.reshape(4, bp)[:, :B].T            # back to (B, 4)
    return dx, y


def _reference_forward(u, x):
    """Pure-JAX reference mirroring the PyTorch forward (batched)."""
    q = x[:, :2]
    q1, q2 = x[:, 0], x[:, 1]
    q_dot = x[:, 2:]
    q1d, q2d = x[:, 2], x[:, 3]
    c2 = jnp.cos(q2)
    m11 = A1 + A2 + 2.0 * A3 * c2
    m12 = A2 + A3 * c2
    m22 = jnp.ones_like(m11) * A2
    m = jnp.stack([jnp.stack([m11, m12], axis=1),
                   jnp.stack([m12, m22], axis=1)], axis=1)
    im = jnp.linalg.inv(m)
    c = jnp.stack([jnp.stack([-2.0 * q2d, -q2d], axis=1),
                   jnp.stack([q1d, jnp.zeros_like(q1d)], axis=1)], axis=1)
    c = A3 * jnp.sin(q2)[:, None, None] * c
    g11 = A4 * jnp.sin(q1) + A5 * jnp.sin(q1 + q2)
    g21 = A5 * jnp.sin(q1 + q2)
    g = jnp.stack([g11, g21], axis=1)
    rhs = -jnp.einsum("bij,bj->bi", c, q_dot) - g + u
    q_ddot = jnp.einsum("bij,bj->bi", im, rhs)
    dx = jnp.concatenate([q_dot, q_ddot], axis=1)
    return dx, q


if __name__ == "__main__":
    # Small case (B < 128 -> single full-extent block).
    ku, kx = jax.random.split(jax.random.PRNGKey(0))
    B = 8
    u = jax.random.normal(ku, (B, 2), dtype=jnp.float32)
    x = jax.random.normal(kx, (B, 4), dtype=jnp.float32)
    dx, y = double_pendulum_forward(u, x)
    jax.block_until_ready((dx, y))
    dx_ref, y_ref = _reference_forward(u, x)
    assert jnp.allclose(dx, dx_ref, atol=1e-4, rtol=1e-4), "dx mismatch (B=8)"
    assert jnp.allclose(y, y_ref, atol=1e-6, rtol=1e-6), "y mismatch (B=8)"

    # Ragged case: not a multiple of 128, still one block.
    ku2, kx2 = jax.random.split(jax.random.PRNGKey(1))
    B2 = 300
    u2 = jax.random.normal(ku2, (B2, 2), dtype=jnp.float32)
    x2 = jax.random.normal(kx2, (B2, 4), dtype=jnp.float32)
    dx2, y2 = double_pendulum_forward(u2, x2)
    jax.block_until_ready((dx2, y2))
    dx2_ref, y2_ref = _reference_forward(u2, x2)
    assert jnp.allclose(dx2, dx2_ref, atol=1e-4, rtol=1e-4), "dx mismatch (B=300)"
    assert jnp.allclose(y2, y2_ref, atol=1e-6, rtol=1e-6), "y mismatch (B=300)"

    # Multi-block case: exercises grid > 1, multiple-of-8 sublane blocks and a
    # ragged (masked) final block.
    ku3, kx3 = jax.random.split(jax.random.PRNGKey(2))
    B3 = 2177
    u3 = jax.random.normal(ku3, (B3, 2), dtype=jnp.float32)
    x3 = jax.random.normal(kx3, (B3, 4), dtype=jnp.float32)
    dx3, y3 = double_pendulum_forward(u3, x3, block_b=1024)
    jax.block_until_ready((dx3, y3))
    dx3_ref, y3_ref = _reference_forward(u3, x3)
    assert jnp.allclose(dx3, dx3_ref, atol=1e-4, rtol=1e-4), "dx mismatch (B=2177)"
    assert jnp.allclose(y3, y3_ref, atol=1e-6, rtol=1e-6), "y mismatch (B=2177)"

    print("KERNEL_OK")
</pallas_src>

<mosaic_0001>
module attributes {stable_mosaic.version = 11 : i64} {
  func.func @_double_pendulum_kernel(%arg0: i32, %arg1: memref<2x1x128xf32, #tpu.memory_space<vmem>>, %arg2: memref<4x1x128xf32, #tpu.memory_space<vmem>>, %arg3: memref<4x1x128xf32, #tpu.memory_space<vmem>>) attributes {dimension_semantics = [#tpu.dimension_semantics<parallel>], iteration_bounds = array<i64: 1>, scalar_prefetch = 0 : i64, scratch_operands = 0 : i64, tpu.core_type = #tpu.core_type<tc>, window_params = [{transform_indices = @transform_0, window_bounds = array<i64: 2, 1, 128>}, {transform_indices = @transform_1, window_bounds = array<i64: 4, 1, 128>}, {transform_indices = @transform_2, window_bounds = array<i64: 4, 1, 128>}]} {
    %c0 = arith.constant 0 : index
    %c0_0 = arith.constant 0 : index
    %c0_1 = arith.constant 0 : index
    %0 = vector.load %arg2[%c0, %c0_0, %c0_1] : memref<4x1x128xf32, #tpu.memory_space<vmem>>, vector<1x1x128xf32>
    %1 = vector.shape_cast %0 : vector<1x1x128xf32> to vector<1x128xf32>
    %c1 = arith.constant 1 : index
    %c0_2 = arith.constant 0 : index
    %c0_3 = arith.constant 0 : index
    %2 = vector.load %arg2[%c1, %c0_2, %c0_3] : memref<4x1x128xf32, #tpu.memory_space<vmem>>, vector<1x1x128xf32>
    %3 = vector.shape_cast %2 : vector<1x1x128xf32> to vector<1x128xf32>
    %c2 = arith.constant 2 : index
    %c0_4 = arith.constant 0 : index
    %c0_5 = arith.constant 0 : index
    %4 = vector.load %arg2[%c2, %c0_4, %c0_5] : memref<4x1x128xf32, #tpu.memory_space<vmem>>, vector<1x1x128xf32>
    %5 = vector.shape_cast %4 : vector<1x1x128xf32> to vector<1x128xf32>
    %c3 = arith.constant 3 : index
    %c0_6 = arith.constant 0 : index
    %c0_7 = arith.constant 0 : index
    %6 = vector.load %arg2[%c3, %c0_6, %c0_7] : memref<4x1x128xf32, #tpu.memory_space<vmem>>, vector<1x1x128xf32>
    %7 = vector.shape_cast %6 : vector<1x1x128xf32> to vector<1x128xf32>
    %c0_8 = arith.constant 0 : index
    %c0_9 = arith.constant 0 : index
    %c0_10 = arith.constant 0 : index
    %8 = vector.load %arg1[%c0_8, %c0_9, %c0_10] : memref<2x1x128xf32, #tpu.memory_space<vmem>>, vector<1x1x128xf32>
    %9 = vector.shape_cast %8 : vector<1x1x128xf32> to vector<1x128xf32>
    %c1_11 = arith.constant 1 : index
    %c0_12 = arith.constant 0 : index
    %c0_13 = arith.constant 0 : index
    %10 = vector.load %arg1[%c1_11, %c0_12, %c0_13] : memref<2x1x128xf32, #tpu.memory_space<vmem>>, vector<1x1x128xf32>
    %11 = vector.shape_cast %10 : vector<1x1x128xf32> to vector<1x128xf32>
    %12 = math.cos %3 : vector<1x128xf32>
    %13 = math.sin %3 : vector<1x128xf32>
    %cst = arith.constant 4.410000e+00 : f32
    %14 = vector.broadcast %cst : f32 to vector<1x128xf32>
    %15 = arith.mulf %14, %12 : vector<1x128xf32>
    %cst_14 = arith.constant 7.142250e+00 : f32
    %16 = vector.broadcast %cst_14 : f32 to vector<1x128xf32>
    %17 = arith.addf %16, %15 : vector<1x128xf32>
    %cst_15 = arith.constant 2.205000e+00 : f32
    %18 = vector.broadcast %cst_15 : f32 to vector<1x128xf32>
    %19 = arith.mulf %18, %12 : vector<1x128xf32>
    %cst_16 = arith.constant 9.922500e-01 : f32
    %20 = vector.broadcast %cst_16 : f32 to vector<1x128xf32>
    %21 = arith.addf %20, %19 : vector<1x128xf32>
    %cst_17 = arith.constant 9.922500e-01 : f32
    %22 = vector.broadcast %cst_17 : f32 to vector<1x128xf32>
    %23 = arith.mulf %17, %22 : vector<1x128xf32>
    %24 = arith.mulf %21, %21 : vector<1x128xf32>
    %25 = arith.subf %23, %24 : vector<1x128xf32>
    %26 = tpu.reciprocal %25 : vector<1x128xf32> -> vector<1x128xf32>
    %cst_18 = arith.constant 2.205000e+00 : f32
    %27 = vector.broadcast %cst_18 : f32 to vector<1x128xf32>
    %28 = arith.mulf %27, %13 : vector<1x128xf32>
    %cst_19 = arith.constant -2.000000e+00 : f32
    %29 = vector.broadcast %cst_19 : f32 to vector<1x128xf32>
    %30 = arith.mulf %29, %7 : vector<1x128xf32>
    %31 = arith.mulf %28, %30 : vector<1x128xf32>
    %32 = arith.mulf %31, %5 : vector<1x128xf32>
    %cst_20 = arith.constant 0.000000e+00 : f32
    %33 = vector.broadcast %cst_20 : f32 to vector<1x128xf32>
    %34 = arith.subf %33, %7 : vector<1x128xf32>
    %35 = arith.mulf %28, %34 : vector<1x128xf32>
    %36 = arith.mulf %35, %7 : vector<1x128xf32>
    %37 = arith.addf %32, %36 : vector<1x128xf32>
    %38 = arith.mulf %28, %5 : vector<1x128xf32>
    %39 = arith.mulf %38, %5 : vector<1x128xf32>
    %40 = arith.addf %1, %3 : vector<1x128xf32>
    %41 = math.sin %40 : vector<1x128xf32>
    %42 = math.sin %1 : vector<1x128xf32>
    %cst_21 = arith.constant 7.400000e+00 : f32
    %43 = vector.broadcast %cst_21 : f32 to vector<1x128xf32>
    %44 = arith.mulf %43, %42 : vector<1x128xf32>
    %cst_22 = arith.constant 2.205000e+00 : f32
    %45 = vector.broadcast %cst_22 : f32 to vector<1x128xf32>
    %46 = arith.mulf %45, %41 : vector<1x128xf32>
    %47 = arith.addf %44, %46 : vector<1x128xf32>
    %cst_23 = arith.constant 2.205000e+00 : f32
    %48 = vector.broadcast %cst_23 : f32 to vector<1x128xf32>
    %49 = arith.mulf %48, %41 : vector<1x128xf32>
    %cst_24 = arith.constant 0.000000e+00 : f32
    %50 = vector.broadcast %cst_24 : f32 to vector<1x128xf32>
    %51 = arith.subf %50, %37 : vector<1x128xf32>
    %52 = arith.subf %51, %47 : vector<1x128xf32>
    %53 = arith.addf %52, %9 : vector<1x128xf32>
    %cst_25 = arith.constant 0.000000e+00 : f32
    %54 = vector.broadcast %cst_25 : f32 to vector<1x128xf32>
    %55 = arith.subf %54, %39 : vector<1x128xf32>
    %56 = arith.subf %55, %49 : vector<1x128xf32>
    %57 = arith.addf %56, %11 : vector<1x128xf32>
    %cst_26 = arith.constant 9.922500e-01 : f32
    %58 = vector.broadcast %cst_26 : f32 to vector<1x128xf32>
    %59 = arith.mulf %58, %53 : vector<1x128xf32>
    %60 = arith.mulf %21, %57 : vector<1x128xf32>
    %61 = arith.subf %59, %60 : vector<1x128xf32>
    %62 = arith.mulf %26, %61 : vector<1x128xf32>
    %63 = arith.mulf %17, %57 : vector<1x128xf32>
    %64 = arith.mulf %21, %53 : vector<1x128xf32>
    %65 = arith.subf %63, %64 : vector<1x128xf32>
    %66 = arith.mulf %26, %65 : vector<1x128xf32>
    %c0_27 = arith.constant 0 : index
    %c0_28 = arith.constant 0 : index
    %c0_29 = arith.constant 0 : index
    %67 = vector.load %arg3[%c0_27, %c0_28, %c0_29] : memref<4x1x128xf32, #tpu.memory_space<vmem>>, vector<1x1x128xf32>
    %68 = vector.shape_cast %67 : vector<1x1x128xf32> to vector<1x128xf32>
    %69 = vector.shape_cast %5 : vector<1x128xf32> to vector<1x1x128xf32>
    tpu.vector_store %arg3[%c0_27, %c0_28, %c0_29], %69 {strides = array<i32>} : memref<4x1x128xf32, #tpu.memory_space<vmem>>, vector<1x1x128xf32>,
    %c1_30 = arith.constant 1 : index
    %c0_31 = arith.constant 0 : index
    %c0_32 = arith.constant 0 : index
    %70 = vector.load %arg3[%c1_30, %c0_31, %c0_32] : memref<4x1x128xf32, #tpu.memory_space<vmem>>, vector<1x1x128xf32>
    %71 = vector.shape_cast %70 : vector<1x1x128xf32> to vector<1x128xf32>
    %72 = vector.shape_cast %7 : vector<1x128xf32> to vector<1x1x128xf32>
    tpu.vector_store %arg3[%c1_30, %c0_31, %c0_32], %72 {strides = array<i32>} : memref<4x1x128xf32, #tpu.memory_space<vmem>>, vector<1x1x128xf32>,
    %c2_33 = arith.constant 2 : index
    %c0_34 = arith.constant 0 : index
    %c0_35 = arith.constant 0 : index
    %73 = vector.load %arg3[%c2_33, %c0_34, %c0_35] : memref<4x1x128xf32, #tpu.memory_space<vmem>>, vector<1x1x128xf32>
    %74 = vector.shape_cast %73 : vector<1x1x128xf32> to vector<1x128xf32>
    %75 = vector.shape_cast %62 : vector<1x128xf32> to vector<1x1x128xf32>
    tpu.vector_store %arg3[%c2_33, %c0_34, %c0_35], %75 {strides = array<i32>} : memref<4x1x128xf32, #tpu.memory_space<vmem>>, vector<1x1x128xf32>,
    %c3_36 = arith.constant 3 : index
    %c0_37 = arith.constant 0 : index
    %c0_38 = arith.constant 0 : index
    %76 = vector.load %arg3[%c3_36, %c0_37, %c0_38] : memref<4x1x128xf32, #tpu.memory_space<vmem>>, vector<1x1x128xf32>
    %77 = vector.shape_cast %76 : vector<1x1x128xf32> to vector<1x128xf32>
    %78 = vector.shape_cast %66 : vector<1x128xf32> to vector<1x1x128xf32>
    tpu.vector_store %arg3[%c3_36, %c0_37, %c0_38], %78 {strides = array<i32>} : memref<4x1x128xf32, #tpu.memory_space<vmem>>, vector<1x1x128xf32>,
    return
  }
  func.func @transform_0(%arg0: i32) -> (i32, i32, i32) {
    %c0_i32 = arith.constant 0 : i32
    %c0_i32_0 = arith.constant 0 : i32
    %c0_i32_1 = arith.constant 0 : i32
    return %c0_i32, %arg0, %c0_i32_0 : i32, i32, i32
  }
  func.func @transform_1(%arg0: i32) -> (i32, i32, i32) {
    %c0_i32 = arith.constant 0 : i32
    %c0_i32_0 = arith.constant 0 : i32
    %c0_i32_1 = arith.constant 0 : i32
    return %c0_i32, %arg0, %c0_i32_0 : i32, i32, i32
  }
  func.func @transform_2(%arg0: i32) -> (i32, i32, i32) {
    %c0_i32 = arith.constant 0 : i32
    %c0_i32_0 = arith.constant 0 : i32
    %c0_i32_1 = arith.constant 0 : i32
    return %c0_i32, %arg0, %c0_i32_0 : i32, i32, i32
  }
}

</mosaic_0001>

<llo_original>
// kernel: double_pendulum_forward.1
$region0: #{double_pendulum_forward.1}
  #allocation0 [shape = 'u32[]', space=smem, size = 0x4, offset = 0x4, fixed_abs, tag = 'smem constant byte address 0x4 - core index']
  #allocation1 [shape = 'u32[72,128]{1,0:T(1,128)}', space=vmem, size = 0x9000, scoped, tag = 'internal scratch']
  %s0 = inlined_call_operand.vmem [shape: f32[2,1,128], index: 0, kind: input, shape index: {}]
  %s1 = inlined_call_operand.vmem [shape: f32[4,1,128], index: 1, kind: input, shape index: {}]
  %s2 = inlined_call_operand.vmem [shape: f32[4,1,128], index: 2, kind: output, shape index: {}]
  %s3 = sld [smem:[#allocation0]]
  $region18: #{double_pendulum_forward.1} parent=0
    _
  %s5 = ssub.s32 1, %s3
  %s6 = scalar_select 0, %s5, %s3
  // Predicated region
  $region2: #{double_pendulum_forward.1} parent=0 // pred_check
    _
  $region3: #{double_pendulum_forward.1} parent=0 // pred_check_branch
    %8 = sbr.rel (0) target = $region5
  $region4: #{double_pendulum_forward.1} parent=0 // pred_region
    _
  $region5: #{double_pendulum_forward.1} parent=0 // pred_fallthru
    _
  // Predicated region
  $region6: #{double_pendulum_forward.1} parent=0 // pred_check
    _
  $region7: #{double_pendulum_forward.1} parent=0 // pred_check_branch
    %10 = sbr.rel (0) target = $region9
  $region8: #{double_pendulum_forward.1} parent=0 // pred_region
    _
  $region9: #{double_pendulum_forward.1} parent=0 // pred_fallthru
    _
  %v11 = vld [vmem:[%s1] sm:$0x1]
  %s12 = scalar_lea.vmem %s1, 1
  %v13 = vld [vmem:[%s12] sm:$0x1]
  %s14 = scalar_lea.vmem %s1, 2
  %v15 = vld [vmem:[%s14] sm:$0x1]
  %s16 = scalar_lea.vmem %s1, 3
  %v17 = vld [vmem:[%s16] sm:$0x1]
  %v18 = vld [vmem:[%s0] sm:$0x1]
  %s19 = scalar_lea.vmem %s0, 1
  %v20 = vld [vmem:[%s19] sm:$0x1]
  %v21 = vand.u32 2147483647, %v13
  %vm22 = vcmp.le.f32.partialorder %v21, 0.7853982
  %vm23 = vcmp.lt.s32.totalorder %v13, 0
  %v24 = vand.u32 %v13, 2139095040
  %v25 = vshrl.u32 %v24, 23
  %v26 = vsub.s32 %v25, 127
  %v27 = vand.u32 2147483647, %v13
  %v28 = vand.u32 %v27, 8388607
  %v29 = vor.u32 %v28, 8388608
  %v30 = vsub.s32 0, %v29
  %v31 = vadd.s32 %v26, 1
  %vm32 = vcmp.gt.s32.totalorder %v31, 0
  %v33 = vsel %vm32, %v31, 0
  %v34 = vshrl.u32 %v33, 5
  %v35 = vand.u32 %v33, 31
  %v36 = vsub.s32 32, %v35
  %v37 = vshrl.u32 683565275, %v36
  %v38 = vshll.u32 683565275, %v35
  %v39 = vshrl.u32 2475754826, %v36
  %v40 = vor.u32 %v38, %v39
  %v41 = vshll.u32 2475754826, %v35
  %v42 = vshrl.u32 2131351028, %v36
  %v43 = vor.u32 %v41, %v42
  %v44 = vshll.u32 2131351028, %v35
  %v45 = vshrl.u32 2102212464, %v36
  %v46 = vor.u32 %v44, %v45
  %v47 = vshll.u32 2102212464, %v35
  %v48 = vshrl.u32 920167782, %v36
  %v49 = vor.u32 %v47, %v48
  %v50 = vshll.u32 920167782, %v35
  %v51 = vshrl.u32 1326507024, %v36
  %v52 = vor.u32 %v50, %v51
  %vm53 = vcmp.lt.s32.totalorder %v34, 1
  %vm54 = vcmp.lt.s32.totalorder %v34, 2
  %vm55 = vcmp.lt.s32.totalorder %v34, 3
  %vm56 = vcmp.lt.s32.totalorder %v34, 4
  %v57 = vsel %vm53, %v37, %v40
  %v58 = vsel %vm56, %v46, 2102212464
  %v59 = vsel %vm55, %v43, %v58
  %v60 = vsel %vm54, %v57, %v59
  %v61 = vsel %vm53, %v40, %v43
  %v62 = vsel %vm56, %v49, 920167782
  %v63 = vsel %vm55, %v46, %v62
  %v64 = vsel %vm54, %v61, %v63
  %v65 = vsel %vm53, %v43, %v46
  %v66 = vsel %vm56, %v52, 1326507024
  %v67 = vsel %vm55, %v49, %v66
  %v68 = vsel %vm54, %v65, %v67
  %v69 = vshll.u32 %v29, 8
  %v70 = vand.u32 %v69, 65535
  %v71 = vshrl.u32 %v69, 16
  %v72 = vand.u32 %v68, 65535
  %v73 = vshrl.u32 %v68, 16
  %v74 = vmul.u32 %v70, %v72
  %v75 = vmul.u32 %v70, %v73
  %v76 = vmul.u32 %v71, %v72
  %v77 = vmul.u32 %v71, %v73
  %v78 = vshll.u32 %v75, 16
  %v79 = vshrl.u32 %v75, 16
  %v80 = vshll.u32 %v76, 16
  %v81 = vshrl.u32 %v76, 16
  %vm82 = vc.u32 %v74, %v78
  %v83 = vsel %vm82, 1, 0
  %v84 = vadd.s32 %v74, %v78
  %v85 = vadd.s32 %v77, %v83
  %vm86 = vc.u32 %v84, %v80
  %v87 = vsel %vm86, 1, 0
  %v88 = vadd.s32 %v84, %v80
  %v89 = vadd.s32 %v85, %v87
  %v90 = vadd.s32 %v89, %v79
  %v91 = vadd.s32 %v90, %v81
  %v92 = vand.u32 %v69, 65535
  %v93 = vshrl.u32 %v69, 16
  %v94 = vand.u32 %v64, 65535
  %v95 = vshrl.u32 %v64, 16
  %v96 = vmul.u32 %v92, %v94
  %v97 = vmul.u32 %v92, %v95
  %v98 = vmul.u32 %v93, %v94
  %v99 = vmul.u32 %v93, %v95
  %v100 = vshll.u32 %v97, 16
  %v101 = vshrl.u32 %v97, 16
  %v102 = vshll.u32 %v98, 16
  %v103 = vshrl.u32 %v98, 16
  %vm104 = vc.u32 %v96, %v100
  %v105 = vsel %vm104, 1, 0
  %v106 = vadd.s32 %v96, %v100
  %v107 = vadd.s32 %v99, %v105
  %vm108 = vc.u32 %v106, %v102
  %v109 = vsel %vm108, 1, 0
  %v110 = vadd.s32 %v106, %v102
  %v111 = vadd.s32 %v107, %v109
  %v112 = vadd.s32 %v111, %v101
  %v113 = vadd.s32 %v112, %v103
  %v114 = vmul.u32 %v69, %v60
  %v115 = vadd.s32 %v91, %v110
  %vm116 = vc.u32 %v91, %v110
  %v117 = vadd.s32 %v113, 1
  %v118 = vsel %vm116, %v117, %v113
  %v119 = vadd.s32 %v114, %v118
  %v120 = vadd.s32 %v119, 536870912
  %v121 = vshrl.u32 %v120, 30
  %v122 = vshll.u32 %v121, 30
  %v123 = vsub.s32 %v119, %v122
  %vm124 = vcmp.lt.s32.totalorder %v123, 0
  %v125 = vsub.s32 0, %v123
  %v126 = vsel %vm124, %v125, %v123
  %v127 = vclz %v126
  %v128 = vsub.s32 %v127, 2
  %vm129 = vcmp.gt.s32.totalorder 0, %v128
  %v130 = vsel %vm129, 0, %v128
  %v131 = vsub.s32 32, %v130
  %v132 = vshll.u32 %v123, %v130
  %v133 = vshrl.u32 %v115, %v131
  %v134 = vor.u32 %v132, %v133
  %v135 = vsub.s32 4294967266, %v130
  %v136 = vadd.s32 %v135, 127
  %v137 = vshll.u32 %v136, 23
  %v138 = vor.u32 4788187, %v137
  %v139 = vand.u32 2147483647, %v138
  %v141 = vcvt.s32.f32 %v134
  %v142 = vmul.f32 %v141, %v139
  %v143 = vxor.u32 %v142, 2147483648
  %v144 = vsel %vm23, %v143, %v142
  %v145 = vsub.s32 4, %v121
  %v146 = vsel %vm23, %v145, %v121
  %v147 = vsel %vm22, %v13, %v144
  %v148 = vsel %vm22, 0, %v146
  %v149 = vmul.f32 %v147, %v147
  %v150 = vmul.f32 %v149, -0.001358992
  %v151 = vadd.f32 %v150, 0.041655596
  %v152 = vmul.f32 %v149, %v151
  %v153 = vadd.f32 %v152, -0.4999988
  %v154 = vmul.f32 %v149, %v153
  %v155 = vadd.f32 1.0, %v154
  %v156 = vmul.f32 %v147, %v147
  %v157 = vmul.f32 %v156, -0.00019511016
  %v158 = vadd.f32 %v157, 0.008332121
  %v159 = vmul.f32 %v156, %v158
  %v160 = vadd.f32 %v159, -0.16666654
  %v161 = vmul.f32 %v156, %v160
  %v162 = vadd.f32 %v161, 1.0
  %v163 = vmul.f32 %v162, %v147
  %vm164 = vweird.f32 %v13
  %v165 = vand.u32 %v148, 3
  %vm166 = vcmp.lt.s32.totalorder %v165, 2
  %vm167 = vcmp.eq.s32.totalorder %v165, 0
  %v168 = vxor.u32 %v163, 2147483648
  %v169 = vsel %vm167, %v155, %v168
  %vm170 = vcmp.eq.s32.totalorder %v165, 2
  %v171 = vxor.u32 %v155, 2147483648
  %v172 = vsel %vm170, %v171, %v163
  %v173 = vsel %vm166, %v169, %v172
  %v174 = vsel %vm164, nan, %v173
  %v175 = vand.u32 2147483647, %v13
  %vm176 = vcmp.le.f32.partialorder %v175, 0.7853982
  %vm177 = vcmp.lt.s32.totalorder %v13, 0
  %v178 = vand.u32 %v13, 2139095040
  %v179 = vshrl.u32 %v178, 23
  %v180 = vsub.s32 %v179, 127
  %v181 = vand.u32 2147483647, %v13
  %v182 = vand.u32 %v181, 8388607
  %v183 = vor.u32 %v182, 8388608
  %v184 = vsub.s32 0, %v183
  %v185 = vadd.s32 %v180, 1
  %vm186 = vcmp.gt.s32.totalorder %v185, 0
  %v187 = vsel %vm186, %v185, 0
  %v188 = vshrl.u32 %v187, 5
  %v189 = vand.u32 %v187, 31
  %v190 = vsub.s32 32, %v189
  %v191 = vshrl.u32 683565275, %v190
  %v192 = vshll.u32 683565275, %v189
  %v193 = vshrl.u32 2475754826, %v190
  %v194 = vor.u32 %v192, %v193
  %v195 = vshll.u32 2475754826, %v189
  %v196 = vshrl.u32 2131351028, %v190
  %v197 = vor.u32 %v195, %v196
  %v198 = vshll.u32 2131351028, %v189
  %v199 = vshrl.u32 2102212464, %v190
  %v200 = vor.u32 %v198, %v199
  %v201 = vshll.u32 2102212464, %v189
  %v202 = vshrl.u32 920167782, %v190
  %v203 = vor.u32 %v201, %v202
  %v204 = vshll.u32 920167782, %v189
  %v205 = vshrl.u32 1326507024, %v190
  %v206 = vor.u32 %v204, %v205
  %vm207 = vcmp.lt.s32.totalorder %v188, 1
  %vm208 = vcmp.lt.s32.totalorder %v188, 2
  %vm209 = vcmp.lt.s32.totalorder %v188, 3
  %vm210 = vcmp.lt.s32.totalorder %v188, 4
  %v211 = vsel %vm207, %v191, %v194
  %v212 = vsel %vm210, %v200, 2102212464
  %v213 = vsel %vm209, %v197, %v212
  %v214 = vsel %vm208, %v211, %v213
  %v215 = vsel %vm207, %v194, %v197
  %v216 = vsel %vm210, %v203, 920167782
  %v217 = vsel %vm209, %v200, %v216
  %v218 = vsel %vm208, %v215, %v217
  %v219 = vsel %vm207, %v197, %v200
  %v220 = vsel %vm210, %v206, 1326507024
  %v221 = vsel %vm209, %v203, %v220
  %v222 = vsel %vm208, %v219, %v221
  %v223 = vshll.u32 %v183, 8
  %v224 = vand.u32 %v223, 65535
  %v225 = vshrl.u32 %v223, 16
  %v226 = vand.u32 %v222, 65535
  %v227 = vshrl.u32 %v222, 16
  %v228 = vmul.u32 %v224, %v226
  %v229 = vmul.u32 %v224, %v227
  %v230 = vmul.u32 %v225, %v226
  %v231 = vmul.u32 %v225, %v227
  %v232 = vshll.u32 %v229, 16
  %v233 = vshrl.u32 %v229, 16
  %v234 = vshll.u32 %v230, 16
  %v235 = vshrl.u32 %v230, 16
  %vm236 = vc.u32 %v228, %v232
  %v237 = vsel %vm236, 1, 0
  %v238 = vadd.s32 %v228, %v232
  %v239 = vadd.s32 %v231, %v237
  %vm240 = vc.u32 %v238, %v234
  %v241 = vsel %vm240, 1, 0
  %v242 = vadd.s32 %v238, %v234
  %v243 = vadd.s32 %v239, %v241
  %v244 = vadd.s32 %v243, %v233
  %v245 = vadd.s32 %v244, %v235
  %v246 = vand.u32 %v223, 65535
  %v247 = vshrl.u32 %v223, 16
  %v248 = vand.u32 %v218, 65535
  %v249 = vshrl.u32 %v218, 16
  %v250 = vmul.u32 %v246, %v248
  %v251 = vmul.u32 %v246, %v249
  %v252 = vmul.u32 %v247, %v248
  %v253 = vmul.u32 %v247, %v249
  %v254 = vshll.u32 %v251, 16
  %v255 = vshrl.u32 %v251, 16
  %v256 = vshll.u32 %v252, 16
  %v257 = vshrl.u32 %v252, 16
  %vm258 = vc.u32 %v250, %v254
  %v259 = vsel %vm258, 1, 0
  %v260 = vadd.s32 %v250, %v254
  %v261 = vadd.s32 %v253, %v259
  %vm262 = vc.u32 %v260, %v256
  %v263 = vsel %vm262, 1, 0
  %v264 = vadd.s32 %v260, %v256
  %v265 = vadd.s32 %v261, %v263
  %v266 = vadd.s32 %v265, %v255
  %v267 = vadd.s32 %v266, %v257
  %v268 = vmul.u32 %v223, %v214
  %v269 = vadd.s32 %v245, %v264
  %vm270 = vc.u32 %v245, %v264
  %v271 = vadd.s32 %v267, 1
  %v272 = vsel %vm270, %v271, %v267
  %v273 = vadd.s32 %v268, %v272
  %v274 = vadd.s32 %v273, 536870912
  %v275 = vshrl.u32 %v274, 30
  %v276 = vshll.u32 %v275, 30
  %v277 = vsub.s32 %v273, %v276
  %vm278 = vcmp.lt.s32.totalorder %v277, 0
  %v279 = vsub.s32 0, %v277
  %v280 = vsel %vm278, %v279, %v277
  %v281 = vclz %v280
  %v282 = vsub.s32 %v281, 2
  %vm283 = vcmp.gt.s32.totalorder 0, %v282
  %v284 = vsel %vm283, 0, %v282
  %v285 = vsub.s32 32, %v284
  %v286 = vshll.u32 %v277, %v284
  %v287 = vshrl.u32 %v269, %v285
  %v288 = vor.u32 %v286, %v287
  %v289 = vsub.s32 4294967266, %v284
  %v290 = vadd.s32 %v289, 127
  %v291 = vshll.u32 %v290, 23
  %v292 = vor.u32 4788187, %v291
  %v293 = vand.u32 2147483647, %v292
  %v295 = vcvt.s32.f32 %v288
  %v296 = vmul.f32 %v295, %v293
  %v297 = vxor.u32 %v296, 2147483648
  %v298 = vsel %vm177, %v297, %v296
  %v299 = vsub.s32 4, %v275
  %v300 = vsel %vm177, %v299, %v275
  %v301 = vsel %vm176, %v13, %v298
  %v302 = vsel %vm176, 0, %v300
  %v303 = vmul.f32 %v301, %v301
  %v304 = vmul.f32 %v303, -0.001358992
  %v305 = vadd.f32 %v304, 0.041655596
  %v306 = vmul.f32 %v303, %v305
  %v307 = vadd.f32 %v306, -0.4999988
  %v308 = vmul.f32 %v303, %v307
  %v309 = vadd.f32 1.0, %v308
  %v310 = vmul.f32 %v301, %v301
  %v311 = vmul.f32 %v310, -0.00019511016
  %v312 = vadd.f32 %v311, 0.008332121
  %v313 = vmul.f32 %v310, %v312
  %v314 = vadd.f32 %v313, -0.16666654
  %v315 = vmul.f32 %v310, %v314
  %v316 = vadd.f32 %v315, 1.0
  %v317 = vmul.f32 %v316, %v301
  %vm318 = vweird.f32 %v13
  %v319 = vadd.s32 %v302, 3
  %v320 = vand.u32 %v319, 3
  %vm321 = vcmp.lt.s32.totalorder %v320, 2
  %vm322 = vcmp.eq.s32.totalorder %v320, 0
  %v323 = vxor.u32 %v317, 2147483648
  %v324 = vsel %vm322, %v309, %v323
  %vm325 = vcmp.eq.s32.totalorder %v320, 2
  %v326 = vxor.u32 %v309, 2147483648
  %v327 = vsel %vm325, %v326, %v317
  %v328 = vsel %vm321, %v324, %v327
  %v329 = vsel %vm318, nan, %v328
  %v330 = vmul.f32 %v174, 4.41
  %v331 = vadd.f32 %v330, 7.14225
  %v332 = vmul.f32 %v174, 2.205
  %v333 = vadd.f32 %v332, 0.99225
  %v334 = vmul.f32 %v331, 0.99225
  %v335 = vmul.f32 %v333, %v333
  %v336 = vsub.f32 %v334, %v335
  %v337 = vrcp.pop %v336
  %v338 = vmul.f32 %v336, %v337
  %v339 = vsub.f32 1.0, %v338
  %v340 = vmul.f32 %v337, %v339
  %v341 = vadd.f32 %v337, %v340
  %vm342 = vweird.f32 %v336
  %vm343 = vweird.f32 %v337
  %vm344 = vmor %vm342, %vm343
  %v345 = vsel %vm344, %v337, %v341
  %v346 = vand.u32 2147483647, %v336
  %vm347 = vcmp.eq.f32.partialorder %v346, 8.507059e+37
  %v348 = vand.u32 %v336, 2147483648
  %v349 = vor.u32 1.1754944e-38, %v348
  %v350 = vsel %vm347, %v349, %v345
  %v351 = vmul.f32 %v329, 2.205
  %v352 = vmul.f32 %v17, -2.0
  %v353 = vmul.f32 %v351, %v352
  %v354 = vmul.f32 %v353, %v15
  %v355 = vsub.f32 0.0, %v17
  %v356 = vmul.f32 %v351, %v355
  %v357 = vmul.f32 %v356, %v17
  %v358 = vadd.f32 %v354, %v357
  %v359 = vmul.f32 %v351, %v15
  %v360 = vmul.f32 %v359, %v15
  %v361 = vadd.f32 %v11, %v13
  %v362 = vand.u32 2147483647, %v361
  %vm363 = vcmp.le.f32.partialorder %v362, 0.7853982
  %vm364 = vcmp.lt.s32.totalorder %v361, 0
  %v365 = vand.u32 %v361, 2139095040
  %v366 = vshrl.u32 %v365, 23
  %v367 = vsub.s32 %v366, 127
  %v368 = vand.u32 2147483647, %v361
  %v369 = vand.u32 %v368, 8388607
  %v370 = vor.u32 %v369, 8388608
  %v371 = vsub.s32 0, %v370
  %v372 = vadd.s32 %v367, 1
  %vm373 = vcmp.gt.s32.totalorder %v372, 0
  %v374 = vsel %vm373, %v372, 0
  %v375 = vshrl.u32 %v374, 5
  %v376 = vand.u32 %v374, 31
  %v377 = vsub.s32 32, %v376
  %v378 = vshrl.u32 683565275, %v377
  %v379 = vshll.u32 683565275, %v376
  %v380 = vshrl.u32 2475754826, %v377
  %v381 = vor.u32 %v379, %v380
  %v382 = vshll.u32 2475754826, %v376
  %v383 = vshrl.u32 2131351028, %v377
  %v384 = vor.u32 %v382, %v383
  %v385 = vshll.u32 2131351028, %v376
  %v386 = vshrl.u32 2102212464, %v377
  %v387 = vor.u32 %v385, %v386
  %v388 = vshll.u32 2102212464, %v376
  %v389 = vshrl.u32 920167782, %v377
  %v390 = vor.u32 %v388, %v389
  %v391 = vshll.u32 920167782, %v376
  %v392 = vshrl.u32 1326507024, %v377
  %v393 = vor.u32 %v391, %v392
  %vm394 = vcmp.lt.s32.totalorder %v375, 1
  %vm395 = vcmp.lt.s32.totalorder %v375, 2
  %vm396 = vcmp.lt.s32.totalorder %v375, 3
  %vm397 = vcmp.lt.s32.totalorder %v375, 4
  %v398 = vsel %vm394, %v378, %v381
  %v399 = vsel %vm397, %v387, 2102212464
  %v400 = vsel %vm396, %v384, %v399
  %v401 = vsel %vm395, %v398, %v400
  %v402 = vsel %vm394, %v381, %v384
  %v403 = vsel %vm397, %v390, 920167782
  %v404 = vsel %vm396, %v387, %v403
  %v405 = vsel %vm395, %v402, %v404
  %v406 = vsel %vm394, %v384, %v387
  %v407 = vsel %vm397, %v393, 1326507024
  %v408 = vsel %vm396, %v390, %v407
  %v409 = vsel %vm395, %v406, %v408
  %v410 = vshll.u32 %v370, 8
  %v411 = vand.u32 %v410, 65535
  %v412 = vshrl.u32 %v410, 16
  %v413 = vand.u32 %v409, 65535
  %v414 = vshrl.u32 %v409, 16
  %v415 = vmul.u32 %v411, %v413
  %v416 = vmul.u32 %v411, %v414
  %v417 = vmul.u32 %v412, %v413
  %v418 = vmul.u32 %v412, %v414
  %v419 = vshll.u32 %v416, 16
  %v420 = vshrl.u32 %v416, 16
  %v421 = vshll.u32 %v417, 16
  %v422 = vshrl.u32 %v417, 16
  %vm423 = vc.u32 %v415, %v419
  %v424 = vsel %vm423, 1, 0
  %v425 = vadd.s32 %v415, %v419
  %v426 = vadd.s32 %v418, %v424
  %vm427 = vc.u32 %v425, %v421
  %v428 = vsel %vm427, 1, 0
  %v429 = vadd.s32 %v425, %v421
  %v430 = vadd.s32 %v426, %v428
  %v431 = vadd.s32 %v430, %v420
  %v432 = vadd.s32 %v431, %v422
  %v433 = vand.u32 %v410, 65535
  %v434 = vshrl.u32 %v410, 16
  %v435 = vand.u32 %v405, 65535
  %v436 = vshrl.u32 %v405, 16
  %v437 = vmul.u32 %v433, %v435
  %v438 = vmul.u32 %v433, %v436
  %v439 = vmul.u32 %v434, %v435
  %v440 = vmul.u32 %v434, %v436
  %v441 = vshll.u32 %v438, 16
  %v442 = vshrl.u32 %v438, 16
  %v443 = vshll.u32 %v439, 16
  %v444 = vshrl.u32 %v439, 16
  %vm445 = vc.u32 %v437, %v441
  %v446 = vsel %vm445, 1, 0
  %v447 = vadd.s32 %v437, %v441
  %v448 = vadd.s32 %v440, %v446
  %vm449 = vc.u32 %v447, %v443
  %v450 = vsel %vm449, 1, 0
  %v451 = vadd.s32 %v447, %v443
  %v452 = vadd.s32 %v448, %v450
  %v453 = vadd.s32 %v452, %v442
  %v454 = vadd.s32 %v453, %v444
  %v455 = vmul.u32 %v410, %v401
  %v456 = vadd.s32 %v432, %v451
  %vm457 = vc.u32 %v432, %v451
  %v458 = vadd.s32 %v454, 1
  %v459 = vsel %vm457, %v458, %v454
  %v460 = vadd.s32 %v455, %v459
  %v461 = vadd.s32 %v460, 536870912
  %v462 = vshrl.u32 %v461, 30
  %v463 = vshll.u32 %v462, 30
  %v464 = vsub.s32 %v460, %v463
  %vm465 = vcmp.lt.s32.totalorder %v464, 0
  %v466 = vsub.s32 0, %v464
  %v467 = vsel %vm465, %v466, %v464
  %v468 = vclz %v467
  %v469 = vsub.s32 %v468, 2
  %vm470 = vcmp.gt.s32.totalorder 0, %v469
  %v471 = vsel %vm470, 0, %v469
  %v472 = vsub.s32 32, %v471
  %v473 = vshll.u32 %v464, %v471
  %v474 = vshrl.u32 %v456, %v472
  %v475 = vor.u32 %v473, %v474
  %v476 = vsub.s32 4294967266, %v471
  %v477 = vadd.s32 %v476, 127
  %v478 = vshll.u32 %v477, 23
  %v479 = vor.u32 4788187, %v478
  %v480 = vand.u32 2147483647, %v479
  %v482 = vcvt.s32.f32 %v475
  %v483 = vmul.f32 %v482, %v480
  %v484 = vxor.u32 %v483, 2147483648
  %v485 = vsel %vm364, %v484, %v483
  %v486 = vsub.s32 4, %v462
  %v487 = vsel %vm364, %v486, %v462
  %v488 = vsel %vm363, %v361, %v485
  %v489 = vsel %vm363, 0, %v487
  %v490 = vmul.f32 %v488, %v488
  %v491 = vmul.f32 %v490, -0.001358992
  %v492 = vadd.f32 %v491, 0.041655596
  %v493 = vmul.f32 %v490, %v492
  %v494 = vadd.f32 %v493, -0.4999988
  %v495 = vmul.f32 %v490, %v494
  %v496 = vadd.f32 1.0, %v495
  %v497 = vmul.f32 %v488, %v488
  %v498 = vmul.f32 %v497, -0.00019511016
  %v499 = vadd.f32 %v498, 0.008332121
  %v500 = vmul.f32 %v497, %v499
  %v501 = vadd.f32 %v500, -0.16666654
  %v502 = vmul.f32 %v497, %v501
  %v503 = vadd.f32 %v502, 1.0
  %v504 = vmul.f32 %v503, %v488
  %vm505 = vweird.f32 %v361
  %v506 = vadd.s32 %v489, 3
  %v507 = vand.u32 %v506, 3
  %vm508 = vcmp.lt.s32.totalorder %v507, 2
  %vm509 = vcmp.eq.s32.totalorder %v507, 0
  %v510 = vxor.u32 %v504, 2147483648
  %v511 = vsel %vm509, %v496, %v510
  %vm512 = vcmp.eq.s32.totalorder %v507, 2
  %v513 = vxor.u32 %v496, 2147483648
  %v514 = vsel %vm512, %v513, %v504
  %v515 = vsel %vm508, %v511, %v514
  %v516 = vsel %vm505, nan, %v515
  %v517 = vand.u32 2147483647, %v11
  %vm518 = vcmp.le.f32.partialorder %v517, 0.7853982
  %vm519 = vcmp.lt.s32.totalorder %v11, 0
  %v520 = vand.u32 %v11, 2139095040
  %v521 = vshrl.u32 %v520, 23
  %v522 = vsub.s32 %v521, 127
  %v523 = vand.u32 2147483647, %v11
  %v524 = vand.u32 %v523, 8388607
  %v525 = vor.u32 %v524, 8388608
  %v526 = vsub.s32 0, %v525
  %v527 = vadd.s32 %v522, 1
  %vm528 = vcmp.gt.s32.totalorder %v527, 0
  %v529 = vsel %vm528, %v527, 0
  %v530 = vshrl.u32 %v529, 5
  %v531 = vand.u32 %v529, 31
  %v532 = vsub.s32 32, %v531
  %v533 = vshrl.u32 683565275, %v532
  %v534 = vshll.u32 683565275, %v531
  %v535 = vshrl.u32 2475754826, %v532
  %v536 = vor.u32 %v534, %v535
  %v537 = vshll.u32 2475754826, %v531
  %v538 = vshrl.u32 2131351028, %v532
  %v539 = vor.u32 %v537, %v538
  %v540 = vshll.u32 2131351028, %v531
  %v541 = vshrl.u32 2102212464, %v532
  %v542 = vor.u32 %v540, %v541
  %v543 = vshll.u32 2102212464, %v531
  %v544 = vshrl.u32 920167782, %v532
  %v545 = vor.u32 %v543, %v544
  %v546 = vshll.u32 920167782, %v531
  %v547 = vshrl.u32 1326507024, %v532
  %v548 = vor.u32 %v546, %v547
  %vm549 = vcmp.lt.s32.totalorder %v530, 1
  %vm550 = vcmp.lt.s32.totalorder %v530, 2
  %vm551 = vcmp.lt.s32.totalorder %v530, 3
  %vm552 = vcmp.lt.s32.totalorder %v530, 4
  %v553 = vsel %vm549, %v533, %v536
  %v554 = vsel %vm552, %v542, 2102212464
  %v555 = vsel %vm551, %v539, %v554
  %v556 = vsel %vm550, %v553, %v555
  %v557 = vsel %vm549, %v536, %v539
  %v558 = vsel %vm552, %v545, 920167782
  %v559 = vsel %vm551, %v542, %v558
  %v560 = vsel %vm550, %v557, %v559
  %v561 = vsel %vm549, %v539, %v542
  %v562 = vsel %vm552, %v548, 1326507024
  %v563 = vsel %vm551, %v545, %v562
  %v564 = vsel %vm550, %v561, %v563
  %v565 = vshll.u32 %v525, 8
  %v566 = vand.u32 %v565, 65535
  %v567 = vshrl.u32 %v565, 16
  %v568 = vand.u32 %v564, 65535
  %v569 = vshrl.u32 %v564, 16
  %v570 = vmul.u32 %v566, %v568
  %v571 = vmul.u32 %v566, %v569
  %v572 = vmul.u32 %v567, %v568
  %v573 = vmul.u32 %v567, %v569
  %v574 = vshll.u32 %v571, 16
  %v575 = vshrl.u32 %v571, 16
  %v576 = vshll.u32 %v572, 16
  %v577 = vshrl.u32 %v572, 16
  %vm578 = vc.u32 %v570, %v574
  %v579 = vsel %vm578, 1, 0
  %v580 = vadd.s32 %v570, %v574
  %v581 = vadd.s32 %v573, %v579
  %vm582 = vc.u32 %v580, %v576
  %v583 = vsel %vm582, 1, 0
  %v584 = vadd.s32 %v580, %v576
  %v585 = vadd.s32 %v581, %v583
  %v586 = vadd.s32 %v585, %v575
  %v587 = vadd.s32 %v586, %v577
  %v588 = vand.u32 %v565, 65535
  %v589 = vshrl.u32 %v565, 16
  %v590 = vand.u32 %v560, 65535
  %v591 = vshrl.u32 %v560, 16
  %v592 = vmul.u32 %v588, %v590
  %v593 = vmul.u32 %v588, %v591
  %v594 = vmul.u32 %v589, %v590
  %v595 = vmul.u32 %v589, %v591
  %v596 = vshll.u32 %v593, 16
  %v597 = vshrl.u32 %v593, 16
  %v598 = vshll.u32 %v594, 16
  %v599 = vshrl.u32 %v594, 16
  %vm600 = vc.u32 %v592, %v596
  %v601 = vsel %vm600, 1, 0
  %v602 = vadd.s32 %v592, %v596
  %v603 = vadd.s32 %v595, %v601
  %vm604 = vc.u32 %v602, %v598
  %v605 = vsel %vm604, 1, 0
  %v606 = vadd.s32 %v602, %v598
  %v607 = vadd.s32 %v603, %v605
  %v608 = vadd.s32 %v607, %v597
  %v609 = vadd.s32 %v608, %v599
  %v610 = vmul.u32 %v565, %v556
  %v611 = vadd.s32 %v587, %v606
  %vm612 = vc.u32 %v587, %v606
  %v613 = vadd.s32 %v609, 1
  %v614 = vsel %vm612, %v613, %v609
  %v615 = vadd.s32 %v610, %v614
  %v616 = vadd.s32 %v615, 536870912
  %v617 = vshrl.u32 %v616, 30
  %v618 = vshll.u32 %v617, 30
  %v619 = vsub.s32 %v615, %v618
  %vm620 = vcmp.lt.s32.totalorder %v619, 0
  %v621 = vsub.s32 0, %v619
  %v622 = vsel %vm620, %v621, %v619
  %v623 = vclz %v622
  %v624 = vsub.s32 %v623, 2
  %vm625 = vcmp.gt.s32.totalorder 0, %v624
  %v626 = vsel %vm625, 0, %v624
  %v627 = vsub.s32 32, %v626
  %v628 = vshll.u32 %v619, %v626
  %v629 = vshrl.u32 %v611, %v627
  %v630 = vor.u32 %v628, %v629
  %v631 = vsub.s32 4294967266, %v626
  %v632 = vadd.s32 %v631, 127
  %v633 = vshll.u32 %v632, 23
  %v634 = vor.u32 4788187, %v633
  %v635 = vand.u32 2147483647, %v634
  %v637 = vcvt.s32.f32 %v630
  %v638 = vmul.f32 %v637, %v635
  %v639 = vxor.u32 %v638, 2147483648
  %v640 = vsel %vm519, %v639, %v638
  %v641 = vsub.s32 4, %v617
  %v642 = vsel %vm519, %v641, %v617
  %v643 = vsel %vm518, %v11, %v640
  %v644 = vsel %vm518, 0, %v642
  %v645 = vmul.f32 %v643, %v643
  %v646 = vmul.f32 %v645, -0.001358992
  %v647 = vadd.f32 %v646, 0.041655596
  %v648 = vmul.f32 %v645, %v647
  %v649 = vadd.f32 %v648, -0.4999988
  %v650 = vmul.f32 %v645, %v649
  %v651 = vadd.f32 1.0, %v650
  %v652 = vmul.f32 %v643, %v643
  %v653 = vmul.f32 %v652, -0.00019511016
  %v654 = vadd.f32 %v653, 0.008332121
  %v655 = vmul.f32 %v652, %v654
  %v656 = vadd.f32 %v655, -0.16666654
  %v657 = vmul.f32 %v652, %v656
  %v658 = vadd.f32 %v657, 1.0
  %v659 = vmul.f32 %v658, %v643
  %vm660 = vweird.f32 %v11
  %v661 = vadd.s32 %v644, 3
  %v662 = vand.u32 %v661, 3
  %vm663 = vcmp.lt.s32.totalorder %v662, 2
  %vm664 = vcmp.eq.s32.totalorder %v662, 0
  %v665 = vxor.u32 %v659, 2147483648
  %v666 = vsel %vm664, %v651, %v665
  %vm667 = vcmp.eq.s32.totalorder %v662, 2
  %v668 = vxor.u32 %v651, 2147483648
  %v669 = vsel %vm667, %v668, %v659
  %v670 = vsel %vm663, %v666, %v669
  %v671 = vsel %vm660, nan, %v670
  %v672 = vmul.f32 %v671, 7.4
  %v673 = vmul.f32 %v516, 2.205
  %v674 = vadd.f32 %v672, %v673
  %v675 = vsub.f32 0.0, %v358
  %v676 = vsub.f32 %v675, %v674
  %v677 = vadd.f32 %v676, %v18
  %v678 = vsub.f32 0.0, %v360
  %v679 = vsub.f32 %v678, %v673
  %v680 = vadd.f32 %v679, %v20
  %v681 = vmul.f32 %v677, 0.99225
  %v682 = vmul.f32 %v333, %v680
  %v683 = vsub.f32 %v681, %v682
  %v684 = vmul.f32 %v350, %v683
  %v685 = vmul.f32 %v331, %v680
  %v686 = vmul.f32 %v333, %v677
  %v687 = vsub.f32 %v685, %v686
  %v688 = vmul.f32 %v350, %v687
  %689 = vst [vmem:[%s2] sm:$0x1] %v15
  %s690 = scalar_lea.vmem %s2, 1
  %691 = vst [vmem:[%s690] sm:$0x1] %v17
  %s692 = scalar_lea.vmem %s2, 2
  %693 = vst [vmem:[%s692] sm:$0x1] %v684
  %s694 = scalar_lea.vmem %s2, 3
  %695 = vst [vmem:[%s694] sm:$0x1] %v688
  // Predicated region
  $region10: #{double_pendulum_forward.1} parent=0 // pred_check
    _
  $region11: #{double_pendulum_forward.1} parent=0 // pred_check_branch
    %697 = sbr.rel (0) target = $region13
  $region12: #{double_pendulum_forward.1} parent=0 // pred_region
    _
  $region13: #{double_pendulum_forward.1} parent=0 // pred_fallthru
    _
  // Predicated region
  $region14: #{double_pendulum_forward.1} parent=0 // pred_check
    _
  $region15: #{double_pendulum_forward.1} parent=0 // pred_check_branch
    %699 = sbr.rel (0) target = $region17
  $region16: #{double_pendulum_forward.1} parent=0 // pred_region
    _
  $region17: #{double_pendulum_forward.1} parent=0 // pred_fallthru
    _

</llo_original>
